<compile_context>
chip_gen: v6e
topology: v6e:2x2x1
jax: 0.10.0
libtpu: 0.0.40
codegen_flags: <defaults>
</compile_context>

<pallas_src>
import jax
import jax.numpy as jnp
from jax import lax
from jax.experimental import pallas as pl
from jax.experimental.pallas import tpu as pltpu


def _round_up(x, m):
    return (x + m - 1) // m * m


def _vmem_capacity_bytes():
    # v5e/v6e: 128 MiB, v7x: 64 MiB per TensorCore.  Fall back to the
    # v7x-safe value if the query is unavailable.
    try:
        cap = getattr(pltpu.get_tpu_info(), "vmem_capacity_bytes", None)
        if cap:
            return int(cap)
    except Exception:
        pass
    return 64 * 1024 * 1024


# ----------------------------------------------------------------------------
# Fused kernel: for one (batch-block, channel-block) tile, run the entire
# coarse->fine chain and write every per-scale result directly in (T_j, C)
# orientation (the module's permuted output layout).
# Ref layout:
#   inputs : x_coarse, high_0..high_{L-1}, (w1, b1, w2, b2) * L
#   outputs: echo (transposed coarse input), out_0 .. out_{L-1}
#   scratch: (PR, PT) f32 staging slab for the single aligned transpose
# ----------------------------------------------------------------------------
def _make_fused_kernel(num_steps, tile_b, tile_c, sizes, col_offs):
    rows = tile_b * tile_c
    t0 = sizes[0]

    def kernel(*refs):
        x_ref = refs[0]
        high_refs = refs[1:1 + num_steps]
        w_refs = refs[1 + num_steps:1 + 5 * num_steps]
        out_refs = refs[1 + 5 * num_steps:2 + 6 * num_steps]
        scr_ref = refs[-1]

        inv_sqrt2 = jnp.float32(0.7071067811865475)

        # Coarse input rows for this tile; also staged as the "echo" output.
        cur = x_ref[...].reshape(rows, t0).astype(jnp.float32)
        scr_ref[0:rows, 0:t0] = cur

        for s in range(num_steps):                      # static unroll over scales
            w1 = w_refs[4 * s][...]
            b1 = w_refs[4 * s + 1][...]
            w2 = w_refs[4 * s + 2][...]
            b2 = w_refs[4 * s + 3][...]
            h = jnp.dot(cur, w1, preferred_element_type=jnp.float32) + b1
            # Exact (erf-based) GELU, matching PyTorch nn.GELU() default.
            g = jnp.float32(0.5) * h * (jnp.float32(1.0) + lax.erf(h * inv_sqrt2))
            y = jnp.dot(g, w2, preferred_element_type=jnp.float32) + b2
            t_s = sizes[1 + s]
            hi = high_refs[s][...].reshape(rows, t_s).astype(jnp.float32)
            cur = hi + y
            scr_ref[0:rows, col_offs[1 + s]:col_offs[1 + s] + t_s] = cur

        # One fully (128,128)-aligned 2-D transpose relayouts every staged
        # per-scale result (rows, T_j) -> (T_j, rows) so the HBM writeback is
        # already in the module's (B, T_j, C) layout.  The padded region of the
        # scratch holds stale garbage; it is never read back below.
        slab_t = jnp.transpose(scr_ref[...], (1, 0))            # (PT, PR)

        for k in range(num_steps + 1):
            lo = col_offs[k]
            t_k = sizes[k]
            blk_t = slab_t[lo:lo + t_k, :]                      # (T_k, PR)
            for kb in range(tile_b):                            # static, small
                out_refs[k][kb] = blk_t[:, kb * tile_c:(kb + 1) * tile_c].astype(
                    out_refs[k].dtype)

    return kernel


# ----------------------------------------------------------------------------
# Wrapper: single pallas_call over a (batch-blocks, channel-blocks) grid.
# x      : (B, C, T0)   coarsest trend (rev[0])
# highs  : list of (B, C, T_s) residual inputs (rev[1] .. rev[L])
# returns: [echo (B,T0,C), out_0 (B,T_1,C), ..., out_{L-1}]  coarse -> fine
# ----------------------------------------------------------------------------
def _fused_chain(x, highs, params):
    B, C, t0 = x.shape
    num_steps = len(params)
    t_outs = [w1.shape[1] for (w1, _b1, _w2, _b2) in params]
    sizes = [t0] + t_outs
    col_offs = [0]
    for t in sizes:
        col_offs.append(col_offs[-1] + t)
    total_t = col_offs[-1]
    dtype = x.dtype

    vmem_cap = _vmem_capacity_bytes()
    act_budget = min(vmem_cap // 4, 32 * 1024 * 1024)

    # Channel tiling: tile_c must divide C and keep both the (.., tile_c, T_j)
    # input blocks and the (.., T_j, tile_c) output blocks legal under the
    # (8,128) BlockSpec rule, i.e. tile_c == C or a 128-multiple divisor of C.
    tile_c = C
    if C % 128 == 0 and C > 512:
        tile_c = 512
        while C % tile_c:
            tile_c -= 128
    n_cblk = C // tile_c

    # Batch tiling: whole batches per block (no partial/masked tail blocks and
    # no wrapper-side padding).  Keep the grid >= 2 steps when possible so a
    # v7x megacore can shard the parallel axes across both TensorCores.
    bytes_per_row = 2 * 2 * 4 * total_t              # in+out slabs, double-buffered
    row_budget = max(tile_c, act_budget // max(bytes_per_row, 1))
    tile_b = max(1, min(B, row_budget // tile_c))
    while tile_b > 1 and (B % tile_b != 0 or (B // tile_b) * n_cblk < 2):
        tile_b -= 1

    rows = tile_b * tile_c
    pr = _round_up(rows, 128)        # scratch padded so the in-kernel transpose
    pt = _round_up(total_t, 128)     # is a fully aligned (128k, 128m) transpose

    grid = (B // tile_b, n_cblk)

    def in_row_spec(t):
        return pl.BlockSpec((tile_b, tile_c, t), lambda ib, ic: (ib, ic, 0))

    def out_row_spec(t):
        return pl.BlockSpec((tile_b, t, tile_c), lambda ib, ic: (ib, 0, ic))

    def resident_spec(a):
        # Constant block index -> stays resident in VMEM, never re-DMA'd.
        return pl.BlockSpec(a.shape, lambda ib, ic: (0, 0))

    in_arrays = [x] + list(highs)
    in_specs = [in_row_spec(t0)] + [in_row_spec(t) for t in t_outs]
    for (w1, b1, w2, b2) in params:
        for a in (w1, b1.reshape(1, -1), w2, b2.reshape(1, -1)):
            in_arrays.append(a)
            in_specs.append(resident_spec(a))

    out_shape = tuple(jax.ShapeDtypeStruct((B, t, C), dtype) for t in sizes)
    out_specs = [out_row_spec(t) for t in sizes]

    flops = B * C * sum(
        2 * (w1.shape[0] * w1.shape[1] + w2.shape[0] * w2.shape[1])
        for (w1, _b1, w2, _b2) in params)
    transcendentals = B * C * sum(t_outs)
    bytes_accessed = 4 * (2 * B * C * total_t
                          + sum(w1.size + b1.size + w2.size + b2.size
                                for (w1, b1, w2, b2) in params))

    outs = pl.pallas_call(
        _make_fused_kernel(num_steps, tile_b, tile_c, sizes, col_offs),
        out_shape=out_shape,
        grid=grid,
        in_specs=in_specs,
        out_specs=out_specs,
        scratch_shapes=[pltpu.VMEM((pr, pt), jnp.float32)],
        compiler_params=pltpu.CompilerParams(
            dimension_semantics=("parallel", "parallel"),
            vmem_limit_bytes=int(min(vmem_cap * 3 // 4, 100 * 1024 * 1024))),
        cost_estimate=pl.CostEstimate(
            flops=int(flops),
            transcendentals=int(transcendentals),
            bytes_accessed=int(bytes_accessed)),
    )(*in_arrays)
    return list(outs)


# ----------------------------------------------------------------------------
# Parameter construction (deterministic, synthetic — no checkpoint load).
# up_sampling_layers[i] maps T = seq_len // dw^(L-i) -> seq_len // dw^(L-1-i).
# Weights stored as (in_features, out_features); bias as (out_features,).
# ----------------------------------------------------------------------------
def make_params(key, seq_len, down_sampling_window, down_sampling_layers):
    params = []
    for i in reversed(range(down_sampling_layers)):
        t_in = seq_len // down_sampling_window ** (i + 1)
        t_out = seq_len // down_sampling_window ** i
        key, k1, k2, k3, k4 = jax.random.split(key, 5)
        w1 = jax.random.normal(k1, (t_in, t_out), jnp.float32) * 0.1
        b1 = jax.random.normal(k2, (t_out,), jnp.float32) * 0.1
        w2 = jax.random.normal(k3, (t_out, t_out), jnp.float32) * 0.1
        b2 = jax.random.normal(k4, (t_out,), jnp.float32) * 0.1
        params.append((w1, b1, w2, b2))
    return params


# ----------------------------------------------------------------------------
# Forward pass — mirrors MDFM_Trend.forward exactly.
# trend_list[j] has shape (B, C, seq_len // dw^j), j = 0..L (fine -> coarse).
# Returns list of (B, T_j, C), ordered fine -> coarse.  All permutes are fused
# into the kernel; the wrapper only reorders the Python list.
# ----------------------------------------------------------------------------
def mdfm_trend_forward(trend_list, params):
    rev = list(trend_list)
    rev.reverse()
    num_steps = len(rev) - 1
    outs = _fused_chain(rev[0], [rev[s + 1] for s in range(num_steps)], params)
    # outs = [coarse echo, step_0, ..., step_{L-1}]  (all already (B, T_j, C))
    out_trend_list = list(outs)
    out_trend_list.reverse()
    return out_trend_list


# Pure-JAX reference (same math) for a correctness check.
def mdfm_trend_reference(trend_list, params):
    rev = list(trend_list)
    rev.reverse()
    out_low = rev[0]
    out_high = rev[1]
    out_trend_list = [jnp.transpose(out_low, (0, 2, 1))]
    for i in range(len(rev) - 1):
        w1, b1, w2, b2 = params[i]
        h = jnp.dot(out_low, w1) + b1
        g = jax.nn.gelu(h, approximate=False)
        res = jnp.dot(g, w2) + b2
        out_high = out_high + res
        out_low = out_high
        if i + 2 <= len(rev) - 1:
            out_high = rev[i + 2]
        out_trend_list.append(jnp.transpose(out_low, (0, 2, 1)))
    out_trend_list.reverse()
    return out_trend_list


if __name__ == "__main__":
    # Small config: seq_len=16, down_sampling_window=2, down_sampling_layers=2
    # -> multi-scale trend lengths: 16, 8, 4
    B, C = 2, 8
    seq_len, dw, layers = 16, 2, 2

    key = jax.random.PRNGKey(0)
    kp, kx = jax.random.split(key)
    params = make_params(kp, seq_len, dw, layers)

    trend_list = []
    for j in range(layers + 1):
        kx, kj = jax.random.split(kx)
        trend_list.append(
            jax.random.normal(kj, (B, C, seq_len // dw ** j), jnp.float32))

    outs = mdfm_trend_forward(trend_list, params)
    outs = [jax.block_until_ready(o) for o in outs]

    refs = mdfm_trend_reference(trend_list, params)
    for o, r in zip(outs, refs):
        assert o.shape == r.shape, (o.shape, r.shape)
        assert jnp.allclose(o, r, atol=1e-5, rtol=1e-5), "mismatch vs reference"

    print("KERNEL_OK")
</pallas_src>

<mosaic_0001>
module attributes {stable_mosaic.version = 11 : i64} {
  func.func @kernel(%arg0: i32, %arg1: i32, %arg2: memref<1x8x4xf32, #tpu.memory_space<vmem>>, %arg3: memref<1x8x8xf32, #tpu.memory_space<vmem>>, %arg4: memref<1x8x16xf32, #tpu.memory_space<vmem>>, %arg5: memref<4x8xf32, #tpu.memory_space<vmem>>, %arg6: memref<1x8xf32, #tpu.memory_space<vmem>>, %arg7: memref<8x8xf32, #tpu.memory_space<vmem>>, %arg8: memref<1x8xf32, #tpu.memory_space<vmem>>, %arg9: memref<8x16xf32, #tpu.memory_space<vmem>>, %arg10: memref<1x16xf32, #tpu.memory_space<vmem>>, %arg11: memref<16x16xf32, #tpu.memory_space<vmem>>, %arg12: memref<1x16xf32, #tpu.memory_space<vmem>>, %arg13: memref<1x4x8xf32, #tpu.memory_space<vmem>>, %arg14: memref<1x8x8xf32, #tpu.memory_space<vmem>>, %arg15: memref<1x16x8xf32, #tpu.memory_space<vmem>>, %arg16: memref<128x128xf32, #tpu.memory_space<vmem>>) attributes {dimension_semantics = [#tpu.dimension_semantics<parallel>, #tpu.dimension_semantics<parallel>], iteration_bounds = array<i64: 2, 1>, scalar_prefetch = 0 : i64, scratch_operands = 1 : i64, tpu.core_type = #tpu.core_type<tc>, window_params = [{transform_indices = @transform_0, window_bounds = array<i64: 1, 8, 4>}, {transform_indices = @transform_1, window_bounds = array<i64: 1, 8, 8>}, {transform_indices = @transform_2, window_bounds = array<i64: 1, 8, 16>}, {pipeline_mode = #tpu.pipeline_mode<synchronous>, transform_indices = @transform_3, window_bounds = array<i64: 4, 8>}, {pipeline_mode = #tpu.pipeline_mode<synchronous>, transform_indices = @transform_4, window_bounds = array<i64: 1, 8>}, {pipeline_mode = #tpu.pipeline_mode<synchronous>, transform_indices = @transform_5, window_bounds = array<i64: 8, 8>}, {pipeline_mode = #tpu.pipeline_mode<synchronous>, transform_indices = @transform_6, window_bounds = array<i64: 1, 8>}, {pipeline_mode = #tpu.pipeline_mode<synchronous>, transform_indices = @transform_7, window_bounds = array<i64: 8, 16>}, {pipeline_mode = #tpu.pipeline_mode<synchronous>, transform_indices = @transform_8, window_bounds = array<i64: 1, 16>}, {pipeline_mode = #tpu.pipeline_mode<synchronous>, transform_indices = @transform_9, window_bounds = array<i64: 16, 16>}, {pipeline_mode = #tpu.pipeline_mode<synchronous>, transform_indices = @transform_10, window_bounds = array<i64: 1, 16>}, {transform_indices = @transform_11, window_bounds = array<i64: 1, 4, 8>}, {transform_indices = @transform_12, window_bounds = array<i64: 1, 8, 8>}, {transform_indices = @transform_13, window_bounds = array<i64: 1, 16, 8>}]} {
    %c0 = arith.constant 0 : index
    %c0_0 = arith.constant 0 : index
    %c0_1 = arith.constant 0 : index
    %0 = vector.load %arg2[%c0, %c0_0, %c0_1] : memref<1x8x4xf32, #tpu.memory_space<vmem>>, vector<1x8x4xf32>
    %1 = vector.shape_cast %0 : vector<1x8x4xf32> to vector<8x4xf32>
    %c0_2 = arith.constant 0 : index
    %c0_3 = arith.constant 0 : index
    %2 = vector.load %arg16[%c0_2, %c0_3] : memref<128x128xf32, #tpu.memory_space<vmem>>, vector<8x4xf32>
    tpu.vector_store %arg16[%c0_2, %c0_3], %1 {strides = array<i32>} : memref<128x128xf32, #tpu.memory_space<vmem>>, vector<8x4xf32>,
    %c0_4 = arith.constant 0 : index
    %c0_5 = arith.constant 0 : index
    %3 = vector.load %arg5[%c0_4, %c0_5] : memref<4x8xf32, #tpu.memory_space<vmem>>, vector<4x8xf32>
    %c0_6 = arith.constant 0 : index
    %c0_7 = arith.constant 0 : index
    %4 = vector.load %arg6[%c0_6, %c0_7] : memref<1x8xf32, #tpu.memory_space<vmem>>, vector<1x8xf32>
    %c0_8 = arith.constant 0 : index
    %c0_9 = arith.constant 0 : index
    %5 = vector.load %arg7[%c0_8, %c0_9] : memref<8x8xf32, #tpu.memory_space<vmem>>, vector<8x8xf32>
    %c0_10 = arith.constant 0 : index
    %c0_11 = arith.constant 0 : index
    %6 = vector.load %arg8[%c0_10, %c0_11] : memref<1x8xf32, #tpu.memory_space<vmem>>, vector<1x8xf32>
    %cst = arith.constant dense<0.000000e+00> : vector<8x8xf32>
    %7 = tpu.matmul %1, %3, %cst {dimension_numbers = #tpu.dot_dimension_numbers<[1], [0], [0], [1], [0, 0, 1, 1], [], []>} : vector<8x4xf32>, vector<4x8xf32>, vector<8x8xf32> -> vector<8x8xf32>
    %8 = vector.broadcast %4 : vector<1x8xf32> to vector<8x8xf32>
    %9 = arith.addf %7, %8 : vector<8x8xf32>
    %cst_12 = arith.constant 5.000000e-01 : f32
    %10 = vector.broadcast %cst_12 : f32 to vector<8x8xf32>
    %11 = arith.mulf %10, %9 : vector<8x8xf32>
    %cst_13 = arith.constant 0.707106769 : f32
    %12 = vector.broadcast %cst_13 : f32 to vector<8x8xf32>
    %13 = arith.mulf %9, %12 : vector<8x8xf32>
    %14 = math.erf %13 : vector<8x8xf32>
    %cst_14 = arith.constant 1.000000e+00 : f32
    %15 = vector.broadcast %cst_14 : f32 to vector<8x8xf32>
    %16 = arith.addf %15, %14 : vector<8x8xf32>
    %17 = arith.mulf %11, %16 : vector<8x8xf32>
    %cst_15 = arith.constant dense<0.000000e+00> : vector<8x8xf32>
    %18 = tpu.matmul %17, %5, %cst_15 {dimension_numbers = #tpu.dot_dimension_numbers<[1], [0], [0], [1], [0, 0, 1, 1], [], []>} : vector<8x8xf32>, vector<8x8xf32>, vector<8x8xf32> -> vector<8x8xf32>
    %19 = vector.broadcast %6 : vector<1x8xf32> to vector<8x8xf32>
    %20 = arith.addf %18, %19 : vector<8x8xf32>
    %c0_16 = arith.constant 0 : index
    %c0_17 = arith.constant 0 : index
    %c0_18 = arith.constant 0 : index
    %21 = vector.load %arg3[%c0_16, %c0_17, %c0_18] : memref<1x8x8xf32, #tpu.memory_space<vmem>>, vector<1x8x8xf32>
    %22 = vector.shape_cast %21 : vector<1x8x8xf32> to vector<8x8xf32>
    %23 = arith.addf %22, %20 : vector<8x8xf32>
    %c0_19 = arith.constant 0 : index
    %c4 = arith.constant 4 : index
    %24 = vector.load %arg16[%c0_19, %c4] : memref<128x128xf32, #tpu.memory_space<vmem>>, vector<8x8xf32>
    tpu.vector_store %arg16[%c0_19, %c4], %23 {strides = array<i32>} : memref<128x128xf32, #tpu.memory_space<vmem>>, vector<8x8xf32>,
    %c0_20 = arith.constant 0 : index
    %c0_21 = arith.constant 0 : index
    %25 = vector.load %arg9[%c0_20, %c0_21] : memref<8x16xf32, #tpu.memory_space<vmem>>, vector<8x16xf32>
    %c0_22 = arith.constant 0 : index
    %c0_23 = arith.constant 0 : index
    %26 = vector.load %arg10[%c0_22, %c0_23] : memref<1x16xf32, #tpu.memory_space<vmem>>, vector<1x16xf32>
    %c0_24 = arith.constant 0 : index
    %c0_25 = arith.constant 0 : index
    %27 = vector.load %arg11[%c0_24, %c0_25] : memref<16x16xf32, #tpu.memory_space<vmem>>, vector<16x16xf32>
    %c0_26 = arith.constant 0 : index
    %c0_27 = arith.constant 0 : index
    %28 = vector.load %arg12[%c0_26, %c0_27] : memref<1x16xf32, #tpu.memory_space<vmem>>, vector<1x16xf32>
    %cst_28 = arith.constant dense<0.000000e+00> : vector<8x16xf32>
    %29 = tpu.matmul %23, %25, %cst_28 {dimension_numbers = #tpu.dot_dimension_numbers<[1], [0], [0], [1], [0, 0, 1, 1], [], []>} : vector<8x8xf32>, vector<8x16xf32>, vector<8x16xf32> -> vector<8x16xf32>
    %30 = vector.broadcast %26 : vector<1x16xf32> to vector<8x16xf32>
    %31 = arith.addf %29, %30 : vector<8x16xf32>
    %cst_29 = arith.constant 5.000000e-01 : f32
    %32 = vector.broadcast %cst_29 : f32 to vector<8x16xf32>
    %33 = arith.mulf %32, %31 : vector<8x16xf32>
    %cst_30 = arith.constant 0.707106769 : f32
    %34 = vector.broadcast %cst_30 : f32 to vector<8x16xf32>
    %35 = arith.mulf %31, %34 : vector<8x16xf32>
    %36 = math.erf %35 : vector<8x16xf32>
    %cst_31 = arith.constant 1.000000e+00 : f32
    %37 = vector.broadcast %cst_31 : f32 to vector<8x16xf32>
    %38 = arith.addf %37, %36 : vector<8x16xf32>
    %39 = arith.mulf %33, %38 : vector<8x16xf32>
    %cst_32 = arith.constant dense<0.000000e+00> : vector<8x16xf32>
    %40 = tpu.matmul %39, %27, %cst_32 {dimension_numbers = #tpu.dot_dimension_numbers<[1], [0], [0], [1], [0, 0, 1, 1], [], []>} : vector<8x16xf32>, vector<16x16xf32>, vector<8x16xf32> -> vector<8x16xf32>
    %41 = vector.broadcast %28 : vector<1x16xf32> to vector<8x16xf32>
    %42 = arith.addf %40, %41 : vector<8x16xf32>
    %c0_33 = arith.constant 0 : index
    %c0_34 = arith.constant 0 : index
    %c0_35 = arith.constant 0 : index
    %43 = vector.load %arg4[%c0_33, %c0_34, %c0_35] : memref<1x8x16xf32, #tpu.memory_space<vmem>>, vector<1x8x16xf32>
    %44 = vector.shape_cast %43 : vector<1x8x16xf32> to vector<8x16xf32>
    %45 = arith.addf %44, %42 : vector<8x16xf32>
    %c0_36 = arith.constant 0 : index
    %c12 = arith.constant 12 : index
    %46 = vector.load %arg16[%c0_36, %c12] : memref<128x128xf32, #tpu.memory_space<vmem>>, vector<8x16xf32>
    tpu.vector_store %arg16[%c0_36, %c12], %45 {strides = array<i32>} : memref<128x128xf32, #tpu.memory_space<vmem>>, vector<8x16xf32>,
    %c0_37 = arith.constant 0 : index
    %c0_38 = arith.constant 0 : index
    %47 = vector.load %arg16[%c0_37, %c0_38] : memref<128x128xf32, #tpu.memory_space<vmem>>, vector<128x128xf32>
    %48 = tpu.transpose %47, [1, 0] : vector<128x128xf32> -> vector<128x128xf32>
    %49 = vector.extract_strided_slice %48 {offsets = [0, 0], sizes = [4, 128], strides = [1, 1]} : vector<128x128xf32> to vector<4x128xf32>
    %50 = vector.extract_strided_slice %49 {offsets = [0, 0], sizes = [4, 8], strides = [1, 1]} : vector<4x128xf32> to vector<4x8xf32>
    %c0_39 = arith.constant 0 : index
    %c0_40 = arith.constant 0 : index
    %c0_41 = arith.constant 0 : index
    %51 = vector.load %arg13[%c0_39, %c0_40, %c0_41] : memref<1x4x8xf32, #tpu.memory_space<vmem>>, vector<1x4x8xf32>
    %52 = vector.shape_cast %51 : vector<1x4x8xf32> to vector<4x8xf32>
    %53 = vector.shape_cast %50 : vector<4x8xf32> to vector<1x4x8xf32>
    tpu.vector_store %arg13[%c0_39, %c0_40, %c0_41], %53 {strides = array<i32>} : memref<1x4x8xf32, #tpu.memory_space<vmem>>, vector<1x4x8xf32>,
    %54 = vector.extract_strided_slice %48 {offsets = [4, 0], sizes = [8, 128], strides = [1, 1]} : vector<128x128xf32> to vector<8x128xf32>
    %55 = vector.extract_strided_slice %54 {offsets = [0, 0], sizes = [8, 8], strides = [1, 1]} : vector<8x128xf32> to vector<8x8xf32>
    %c0_42 = arith.constant 0 : index
    %c0_43 = arith.constant 0 : index
    %c0_44 = arith.constant 0 : index
    %56 = vector.load %arg14[%c0_42, %c0_43, %c0_44] : memref<1x8x8xf32, #tpu.memory_space<vmem>>, vector<1x8x8xf32>
    %57 = vector.shape_cast %56 : vector<1x8x8xf32> to vector<8x8xf32>
    %58 = vector.shape_cast %55 : vector<8x8xf32> to vector<1x8x8xf32>
    tpu.vector_store %arg14[%c0_42, %c0_43, %c0_44], %58 {strides = array<i32>} : memref<1x8x8xf32, #tpu.memory_space<vmem>>, vector<1x8x8xf32>,
    %59 = vector.extract_strided_slice %48 {offsets = [12, 0], sizes = [16, 128], strides = [1, 1]} : vector<128x128xf32> to vector<16x128xf32>
    %60 = vector.extract_strided_slice %59 {offsets = [0, 0], sizes = [16, 8], strides = [1, 1]} : vector<16x128xf32> to vector<16x8xf32>
    %c0_45 = arith.constant 0 : index
    %c0_46 = arith.constant 0 : index
    %c0_47 = arith.constant 0 : index
    %61 = vector.load %arg15[%c0_45, %c0_46, %c0_47] : memref<1x16x8xf32, #tpu.memory_space<vmem>>, vector<1x16x8xf32>
    %62 = vector.shape_cast %61 : vector<1x16x8xf32> to vector<16x8xf32>
    %63 = vector.shape_cast %60 : vector<16x8xf32> to vector<1x16x8xf32>
    tpu.vector_store %arg15[%c0_45, %c0_46, %c0_47], %63 {strides = array<i32>} : memref<1x16x8xf32, #tpu.memory_space<vmem>>, vector<1x16x8xf32>,
    return
  }
  func.func @transform_0(%arg0: i32, %arg1: i32) -> (i32, i32, i32) {
    %c0_i32 = arith.constant 0 : i32
    %c0_i32_0 = arith.constant 0 : i32
    return %arg0, %arg1, %c0_i32 : i32, i32, i32
  }
  func.func @transform_1(%arg0: i32, %arg1: i32) -> (i32, i32, i32) {
    %c0_i32 = arith.constant 0 : i32
    %c0_i32_0 = arith.constant 0 : i32
    return %arg0, %arg1, %c0_i32 : i32, i32, i32
  }
  func.func @transform_2(%arg0: i32, %arg1: i32) -> (i32, i32, i32) {
    %c0_i32 = arith.constant 0 : i32
    %c0_i32_0 = arith.constant 0 : i32
    return %arg0, %arg1, %c0_i32 : i32, i32, i32
  }
  func.func @transform_3(%arg0: i32, %arg1: i32) -> (i32, i32) {
    %c0_i32 = arith.constant 0 : i32
    %c0_i32_0 = arith.constant 0 : i32
    %c0_i32_1 = arith.constant 0 : i32
    return %c0_i32, %c0_i32_0 : i32, i32
  }
  func.func @transform_4(%arg0: i32, %arg1: i32) -> (i32, i32) {
    %c0_i32 = arith.constant 0 : i32
    %c0_i32_0 = arith.constant 0 : i32
    %c0_i32_1 = arith.constant 0 : i32
    return %c0_i32, %c0_i32_0 : i32, i32
  }
  func.func @transform_5(%arg0: i32, %arg1: i32) -> (i32, i32) {
    %c0_i32 = arith.constant 0 : i32
    %c0_i32_0 = arith.constant 0 : i32
    %c0_i32_1 = arith.constant 0 : i32
    return %c0_i32, %c0_i32_0 : i32, i32
  }
  func.func @transform_6(%arg0: i32, %arg1: i32) -> (i32, i32) {
    %c0_i32 = arith.constant 0 : i32
    %c0_i32_0 = arith.constant 0 : i32
    %c0_i32_1 = arith.constant 0 : i32
    return %c0_i32, %c0_i32_0 : i32, i32
  }
  func.func @transform_7(%arg0: i32, %arg1: i32) -> (i32, i32) {
    %c0_i32 = arith.constant 0 : i32
    %c0_i32_0 = arith.constant 0 : i32
    %c0_i32_1 = arith.constant 0 : i32
    return %c0_i32, %c0_i32_0 : i32, i32
  }
  func.func @transform_8(%arg0: i32, %arg1: i32) -> (i32, i32) {
    %c0_i32 = arith.constant 0 : i32
    %c0_i32_0 = arith.constant 0 : i32
    %c0_i32_1 = arith.constant 0 : i32
    return %c0_i32, %c0_i32_0 : i32, i32
  }
  func.func @transform_9(%arg0: i32, %arg1: i32) -> (i32, i32) {
    %c0_i32 = arith.constant 0 : i32
    %c0_i32_0 = arith.constant 0 : i32
    %c0_i32_1 = arith.constant 0 : i32
    return %c0_i32, %c0_i32_0 : i32, i32
  }
  func.func @transform_10(%arg0: i32, %arg1: i32) -> (i32, i32) {
    %c0_i32 = arith.constant 0 : i32
    %c0_i32_0 = arith.constant 0 : i32
    %c0_i32_1 = arith.constant 0 : i32
    return %c0_i32, %c0_i32_0 : i32, i32
  }
  func.func @transform_11(%arg0: i32, %arg1: i32) -> (i32, i32, i32) {
    %c0_i32 = arith.constant 0 : i32
    %c0_i32_0 = arith.constant 0 : i32
    return %arg0, %c0_i32, %arg1 : i32, i32, i32
  }
  func.func @transform_12(%arg0: i32, %arg1: i32) -> (i32, i32, i32) {
    %c0_i32 = arith.constant 0 : i32
    %c0_i32_0 = arith.constant 0 : i32
    return %arg0, %c0_i32, %arg1 : i32, i32, i32
  }
  func.func @transform_13(%arg0: i32, %arg1: i32) -> (i32, i32, i32) {
    %c0_i32 = arith.constant 0 : i32
    %c0_i32_0 = arith.constant 0 : i32
    return %arg0, %c0_i32, %arg1 : i32, i32, i32
  }
}

</mosaic_0001>

<llo_original>
// kernel: tpu_custom_call.1
$region0: #{tpu_custom_call.1}
  #allocation0 [shape = 'u32[]', space=smem, size = 0x4, offset = 0x4, fixed_abs, tag = 'smem constant byte address 0x4 - core index']
  #allocation1 [shape = 'u32[144,128]{1,0:T(1,128)}', space=vmem, size = 0x12000, scoped, tag = 'internal scratch']
  #allocation2 [shape = 'f32[128,128]{1,0:T(8,128)}', space=vmem, size = 0x10000, scoped, tag = 'scratch operand']
  %s0 = inlined_call_operand.vmem [shape: f32[2,8,4], index: 0, kind: input, shape index: {}]
  %s1 = inlined_call_operand.vmem [shape: f32[2,8,8], index: 1, kind: input, shape index: {}]
  %s2 = inlined_call_operand.hbm [shape: f32[2,8,16], index: 2, kind: input, shape index: {}]
  %s3 = inlined_call_operand.hbm [shape: f32[4,8], index: 3, kind: input, shape index: {}]
  %s4 = inlined_call_operand.vmem [shape: f32[1,8], index: 4, kind: input, shape index: {}]
  %s5 = inlined_call_operand.hbm [shape: f32[8,8], index: 5, kind: input, shape index: {}]
  %s6 = inlined_call_operand.vmem [shape: f32[1,8], index: 6, kind: input, shape index: {}]
  %s7 = inlined_call_operand.hbm [shape: f32[8,16], index: 7, kind: input, shape index: {}]
  %s8 = inlined_call_operand.vmem [shape: f32[1,16], index: 8, kind: input, shape index: {}]
  %s9 = inlined_call_operand.vmem [shape: f32[16,16], index: 9, kind: input, shape index: {}]
  %s10 = inlined_call_operand.vmem [shape: f32[1,16], index: 10, kind: input, shape index: {}]
  %s11 = inlined_call_operand.hbm [shape: f32[2,4,8], index: 11, kind: output, shape index: {0}]
  %s12 = inlined_call_operand.hbm [shape: f32[2,8,8], index: 12, kind: output, shape index: {1}]
  %s13 = inlined_call_operand.vmem [shape: f32[2,16,8], index: 13, kind: output, shape index: {2}]
  %14 = xla_tuple %s11, %s12, %s13
  %s15 = sld [smem:[#allocation0]]
  $region109: #{tpu_custom_call.1} parent=0
    _
  %s17 = ssub.s32 1, %s15
  %s18 = scalar_select 0, %s17, %s15
  $region1: #{tpu_custom_call.1} parent=0
    #allocation3 [shape = 'u8[8192]{0}', space=vmem, size = 0x2000, scoped, tag = 'input window, operand 2']
    #allocation4 [shape = 's32[2]{0}', space=sflag, size = 0x8, scoped, tag = 'scoped memory for tpu_custom_call.1']
    #allocation5 [shape = 's32[2]{0}', space=sflag, size = 0x8, scoped, tag = 'scoped memory for tpu_custom_call.1']
    #allocation6 [shape = 'u8[2048]{0}', space=vmem, size = 0x800, scoped, tag = 'input window, operand 3, single buffered']
    #allocation7 [shape = 's32[1]{0}', space=sflag, size = 0x4, scoped, tag = 'scoped memory for tpu_custom_call.1']
    #allocation8 [shape = 'u8[4096]{0}', space=vmem, size = 0x1000, scoped, tag = 'input window, operand 5, single buffered']
    #allocation9 [shape = 'u8[4096]{0}', space=vmem, size = 0x1000, scoped, tag = 'input window, operand 7, single buffered']
    #allocation10 [shape = 's32[1]{0}', space=sflag, size = 0x4, scoped, tag = 'scoped memory for tpu_custom_call.1']
    #allocation11 [shape = 'u8[4096]{0}', space=vmem, size = 0x1000, scoped, tag = 'output window, operand 0']
    #allocation12 [shape = 'u8[8192]{0}', space=vmem, size = 0x2000, scoped, tag = 'output window, operand 1']
    #allocation13 [shape = 's32[2]{0}', space=sflag, size = 0x8, scoped, tag = 'scoped memory for tpu_custom_call.1']
    %19 = vsyncpa [#allocation4], 0
    %s20 = scalar_lea.sflag [#allocation4], 1
    %21 = vsyncpa %s20, 0
    %22 = vsyncpa [#allocation7], 0
    %23 = vsyncpa [#allocation10], 0
    %24 = vsyncpa [#allocation5], 0
    %s25 = scalar_lea.sflag [#allocation5], 1
    %26 = vsyncpa %s25, 0
    %27 = vsyncpa [#allocation13], 0
    %s28 = scalar_lea.sflag [#allocation13], 1
    %29 = vsyncpa %s28, 0
    loop: start=0, step=1, limit=4
    $region2: #{tpu_custom_call.1} parent=1 // loop_pre_header
      _
    $region3: #{tpu_custom_call.1} parent=1 // loop_header
      %s31 = sphi 0, %s35
      %p32 = scmp.ge.s32.totalorder %s31, 4
      %s38 = sphi 0, %s50
      %s39 = sphi 0, %s46
      %s40 = sphi 0, %s38
      %s41 = sphi 0, %s39
      %s42 = sphi 0, %s40
      %s43 = sphi 0, %s41
      %s55 = sphi 0, %s57
      %s58 = sphi 0, %s55
      %s59 = sphi 0, %s58
      %s75 = sphi 0, %s59
      %s83 = sphi 0, %s85
      %s86 = sphi 0, %s83
      %s87 = sphi 0, %s86
      %s103 = sphi 0, %s87
      %s111 = sphi 0, %s113
      %s114 = sphi 0, %s111
      %s115 = sphi 0, %s114
      %s131 = sphi 0, %s115
      %s135 = sphi 0, %s135
      %s137 = sphi 0, %s135
      %s138 = sphi 0, %s137
      %s152 = sphi 0, %s138
      %s156 = sphi 0, %s156
      %s158 = sphi 0, %s156
      %s159 = sphi 0, %s158
      %s173 = sphi 0, %s159
      %s177 = sphi 0, %s177
      %s179 = sphi 0, %s177
      %s180 = sphi 0, %s179
      %s194 = sphi 0, %s180
      %s198 = sphi 0, %s198
      %s200 = sphi 0, %s198
      %s201 = sphi 0, %s200
      %s215 = sphi 0, %s201
      %s219 = sphi 0, %s219
      %s221 = sphi 0, %s219
      %s222 = sphi 0, %s221
      %s236 = sphi 0, %s222
      %s240 = sphi 0, %s240
      %s242 = sphi 0, %s240
      %s243 = sphi 0, %s242
      %s257 = sphi 0, %s243
      %s261 = sphi 0, %s261
      %s263 = sphi 0, %s261
      %s264 = sphi 0, %s263
      %s278 = sphi 0, %s264
      %s282 = sphi 0, %s282
      %s284 = sphi 0, %s282
      %s285 = sphi 0, %s284
      %s299 = sphi 0, %s285
      %s307 = sphi 0, %s309
      %s310 = sphi 0, %s307
      %s311 = sphi 0, %s310
      %s327 = sphi 0, %s311
      %s335 = sphi 0, %s337
      %s338 = sphi 0, %s335
      %s339 = sphi 0, %s338
      %s355 = sphi 0, %s339
      %s363 = sphi 0, %s365
      %s366 = sphi 0, %s363
      %s367 = sphi 0, %s366
      %s383 = sphi 0, %s367
    $region4: #{tpu_custom_call.1} parent=1 // loop_header_branch
      %34 = sbr.rel (%p32) target = $region8
    $region5: #{tpu_custom_call.1} parent=1 // loop_body
      %s36 = ssub.s32 %s31, 1
      %s37 = ssub.s32 %s31, 2
      %s44 = sadd.s32 1, %s39
      %p45 = scmp.ge.s32.totalorder %s44, 1
      %s46 = scalar_select %p45, 0, %s44
      %s47 = sadd.s32 1, %s38
      %s48 = scalar_select %p45, %s47, %s38
      %p49 = scmp.ge.s32.totalorder %s48, 2
      %s50 = scalar_select %p49, 0, %s48
      %s51 = ssub.s32 %s38, %s50
      %s52 = ssub.s32 %s39, %s46
      %s53 = sor.u32 %s51, %s52
      %p54 = scmp.eq.s32.totalorder %s53, 0
      %s56 = sadd.s32 %s55, 1
      %s57 = scalar_select %p54, %s55, %s56
      %p60 = pneg %p54
      %p61 = scmp.eq.s32.totalorder %s31, 1
      %p62 = por %p60, %p61
      %p63 = scmp.ne.s32.totalorder %s55, %s58
      %p64 = scmp.eq.s32.totalorder %s31, 0
      %p65 = por %p63, %p64
      %p66 = scmp.ne.s32.totalorder %s55, %s58
      %p67 = scmp.eq.s32.totalorder %s36, 1
      %p68 = por %p66, %p67
      %p69 = scmp.ne.s32.totalorder %s58, %s59
      %p70 = scmp.eq.s32.totalorder %s36, 0
      %p71 = por %p69, %p70
      %p72 = scmp.ne.s32.totalorder %s58, %s59
      %p73 = scmp.eq.s32.totalorder %s37, 1
      %p74 = por %p72, %p73
      %p76 = scmp.ne.s32.totalorder %s59, %s75
      %p77 = scmp.eq.s32.totalorder %s37, 0
      %p78 = por %p76, %p77
      %s79 = ssub.s32 %s38, %s50
      %s80 = ssub.s32 %s39, %s46
      %s81 = sor.u32 %s79, %s80
      %p82 = scmp.eq.s32.totalorder %s81, 0
      %s84 = sadd.s32 %s83, 1
      %s85 = scalar_select %p82, %s83, %s84
      %p88 = pneg %p82
      %p89 = scmp.eq.s32.totalorder %s31, 1
      %p90 = por %p88, %p89
      %p91 = scmp.ne.s32.totalorder %s83, %s86
      %p92 = scmp.eq.s32.totalorder %s31, 0
      %p93 = por %p91, %p92
      %p94 = scmp.ne.s32.totalorder %s83, %s86
      %p95 = scmp.eq.s32.totalorder %s36, 1
      %p96 = por %p94, %p95
      %p97 = scmp.ne.s32.totalorder %s86, %s87
      %p98 = scmp.eq.s32.totalorder %s36, 0
      %p99 = por %p97, %p98
      %p100 = scmp.ne.s32.totalorder %s86, %s87
      %p101 = scmp.eq.s32.totalorder %s37, 1
      %p102 = por %p100, %p101
      %p104 = scmp.ne.s32.totalorder %s87, %s103
      %p105 = scmp.eq.s32.totalorder %s37, 0
      %p106 = por %p104, %p105
      %s107 = ssub.s32 %s38, %s50
      %s108 = ssub.s32 %s39, %s46
      %s109 = sor.u32 %s107, %s108
      %p110 = scmp.eq.s32.totalorder %s109, 0
      %s112 = sadd.s32 %s111, 1
      %s113 = scalar_select %p110, %s111, %s112
      %p116 = pneg %p110
      %p117 = scmp.eq.s32.totalorder %s31, 1
      %p118 = por %p116, %p117
      %p119 = scmp.ne.s32.totalorder %s111, %s114
      %p120 = scmp.eq.s32.totalorder %s31, 0
      %p121 = por %p119, %p120
      %p122 = scmp.ne.s32.totalorder %s111, %s114
      %p123 = scmp.eq.s32.totalorder %s36, 1
      %p124 = por %p122, %p123
      %p125 = scmp.ne.s32.totalorder %s114, %s115
      %p126 = scmp.eq.s32.totalorder %s36, 0
      %p127 = por %p125, %p126
      %p128 = scmp.ne.s32.totalorder %s114, %s115
      %p129 = scmp.eq.s32.totalorder %s37, 1
      %p130 = por %p128, %p129
      %p132 = scmp.ne.s32.totalorder %s115, %s131
      %p133 = scmp.eq.s32.totalorder %s37, 0
      %p134 = por %p132, %p133
      %s136 = sadd.s32 %s135, 1
      %p139 = scmp.eq.s32.totalorder %s31, 1
      %p140 = scmp.ne.s32.totalorder %s135, %s137
      %p141 = scmp.eq.s32.totalorder %s31, 0
      %p142 = por %p140, %p141
      %p143 = scmp.ne.s32.totalorder %s135, %s137
      %p144 = scmp.eq.s32.totalorder %s36, 1
      %p145 = por %p143, %p144
      %p146 = scmp.ne.s32.totalorder %s137, %s138
      %p147 = scmp.eq.s32.totalorder %s36, 0
      %p148 = por %p146, %p147
      %p149 = scmp.ne.s32.totalorder %s137, %s138
      %p150 = scmp.eq.s32.totalorder %s37, 1
      %p151 = por %p149, %p150
      %p153 = scmp.ne.s32.totalorder %s138, %s152
      %p154 = scmp.eq.s32.totalorder %s37, 0
      %p155 = por %p153, %p154
      %s157 = sadd.s32 %s156, 1
      %p160 = scmp.eq.s32.totalorder %s31, 1
      %p161 = scmp.ne.s32.totalorder %s156, %s158
      %p162 = scmp.eq.s32.totalorder %s31, 0
      %p163 = por %p161, %p162
      %p164 = scmp.ne.s32.totalorder %s156, %s158
      %p165 = scmp.eq.s32.totalorder %s36, 1
      %p166 = por %p164, %p165
      %p167 = scmp.ne.s32.totalorder %s158, %s159
      %p168 = scmp.eq.s32.totalorder %s36, 0
      %p169 = por %p167, %p168
      %p170 = scmp.ne.s32.totalorder %s158, %s159
      %p171 = scmp.eq.s32.totalorder %s37, 1
      %p172 = por %p170, %p171
      %p174 = scmp.ne.s32.totalorder %s159, %s173
      %p175 = scmp.eq.s32.totalorder %s37, 0
      %p176 = por %p174, %p175
      %s178 = sadd.s32 %s177, 1
      %p181 = scmp.eq.s32.totalorder %s31, 1
      %p182 = scmp.ne.s32.totalorder %s177, %s179
      %p183 = scmp.eq.s32.totalorder %s31, 0
      %p184 = por %p182, %p183
      %p185 = scmp.ne.s32.totalorder %s177, %s179
      %p186 = scmp.eq.s32.totalorder %s36, 1
      %p187 = por %p185, %p186
      %p188 = scmp.ne.s32.totalorder %s179, %s180
      %p189 = scmp.eq.s32.totalorder %s36, 0
      %p190 = por %p188, %p189
      %p191 = scmp.ne.s32.totalorder %s179, %s180
      %p192 = scmp.eq.s32.totalorder %s37, 1
      %p193 = por %p191, %p192
      %p195 = scmp.ne.s32.totalorder %s180, %s194
      %p196 = scmp.eq.s32.totalorder %s37, 0
      %p197 = por %p195, %p196
      %s199 = sadd.s32 %s198, 1
      %p202 = scmp.eq.s32.totalorder %s31, 1
      %p203 = scmp.ne.s32.totalorder %s198, %s200
      %p204 = scmp.eq.s32.totalorder %s31, 0
      %p205 = por %p203, %p204
      %p206 = scmp.ne.s32.totalorder %s198, %s200
      %p207 = scmp.eq.s32.totalorder %s36, 1
      %p208 = por %p206, %p207
      %p209 = scmp.ne.s32.totalorder %s200, %s201
      %p210 = scmp.eq.s32.totalorder %s36, 0
      %p211 = por %p209, %p210
      %p212 = scmp.ne.s32.totalorder %s200, %s201
      %p213 = scmp.eq.s32.totalorder %s37, 1
      %p214 = por %p212, %p213
      %p216 = scmp.ne.s32.totalorder %s201, %s215
      %p217 = scmp.eq.s32.totalorder %s37, 0
      %p218 = por %p216, %p217
      %s220 = sadd.s32 %s219, 1
      %p223 = scmp.eq.s32.totalorder %s31, 1
      %p224 = scmp.ne.s32.totalorder %s219, %s221
      %p225 = scmp.eq.s32.totalorder %s31, 0
      %p226 = por %p224, %p225
      %p227 = scmp.ne.s32.totalorder %s219, %s221
      %p228 = scmp.eq.s32.totalorder %s36, 1
      %p229 = por %p227, %p228
      %p230 = scmp.ne.s32.totalorder %s221, %s222
      %p231 = scmp.eq.s32.totalorder %s36, 0
      %p232 = por %p230, %p231
      %p233 = scmp.ne.s32.totalorder %s221, %s222
      %p234 = scmp.eq.s32.totalorder %s37, 1
      %p235 = por %p233, %p234
      %p237 = scmp.ne.s32.totalorder %s222, %s236
      %p238 = scmp.eq.s32.totalorder %s37, 0
      %p239 = por %p237, %p238
      %s241 = sadd.s32 %s240, 1
      %p244 = scmp.eq.s32.totalorder %s31, 1
      %p245 = scmp.ne.s32.totalorder %s240, %s242
      %p246 = scmp.eq.s32.totalorder %s31, 0
      %p247 = por %p245, %p246
      %p248 = scmp.ne.s32.totalorder %s240, %s242
      %p249 = scmp.eq.s32.totalorder %s36, 1
      %p250 = por %p248, %p249
      %p251 = scmp.ne.s32.totalorder %s242, %s243
      %p252 = scmp.eq.s32.totalorder %s36, 0
      %p253 = por %p251, %p252
      %p254 = scmp.ne.s32.totalorder %s242, %s243
      %p255 = scmp.eq.s32.totalorder %s37, 1
      %p256 = por %p254, %p255
      %p258 = scmp.ne.s32.totalorder %s243, %s257
      %p259 = scmp.eq.s32.totalorder %s37, 0
      %p260 = por %p258, %p259
      %s262 = sadd.s32 %s261, 1
      %p265 = scmp.eq.s32.totalorder %s31, 1
      %p266 = scmp.ne.s32.totalorder %s261, %s263
      %p267 = scmp.eq.s32.totalorder %s31, 0
      %p268 = por %p266, %p267
      %p269 = scmp.ne.s32.totalorder %s261, %s263
      %p270 = scmp.eq.s32.totalorder %s36, 1
      %p271 = por %p269, %p270
      %p272 = scmp.ne.s32.totalorder %s263, %s264
      %p273 = scmp.eq.s32.totalorder %s36, 0
      %p274 = por %p272, %p273
      %p275 = scmp.ne.s32.totalorder %s263, %s264
      %p276 = scmp.eq.s32.totalorder %s37, 1
      %p277 = por %p275, %p276
      %p279 = scmp.ne.s32.totalorder %s264, %s278
      %p280 = scmp.eq.s32.totalorder %s37, 0
      %p281 = por %p279, %p280
      %s283 = sadd.s32 %s282, 1
      %p286 = scmp.eq.s32.totalorder %s31, 1
      %p287 = scmp.ne.s32.totalorder %s282, %s284
      %p288 = scmp.eq.s32.totalorder %s31, 0
      %p289 = por %p287, %p288
      %p290 = scmp.ne.s32.totalorder %s282, %s284
      %p291 = scmp.eq.s32.totalorder %s36, 1
      %p292 = por %p290, %p291
      %p293 = scmp.ne.s32.totalorder %s284, %s285
      %p294 = scmp.eq.s32.totalorder %s36, 0
      %p295 = por %p293, %p294
      %p296 = scmp.ne.s32.totalorder %s284, %s285
      %p297 = scmp.eq.s32.totalorder %s37, 1
      %p298 = por %p296, %p297
      %p300 = scmp.ne.s32.totalorder %s285, %s299
      %p301 = scmp.eq.s32.totalorder %s37, 0
      %p302 = por %p300, %p301
      %s303 = ssub.s32 %s38, %s50
      %s304 = ssub.s32 %s39, %s46
      %s305 = sor.u32 %s303, %s304
      %p306 = scmp.eq.s32.totalorder %s305, 0
      %s308 = sadd.s32 %s307, 1
      %s309 = scalar_select %p306, %s307, %s308
      %p312 = pneg %p306
      %p313 = scmp.eq.s32.totalorder %s31, 1
      %p314 = por %p312, %p313
      %p315 = scmp.ne.s32.totalorder %s307, %s310
      %p316 = scmp.eq.s32.totalorder %s31, 0
      %p317 = por %p315, %p316
      %p318 = scmp.ne.s32.totalorder %s307, %s310
      %p319 = scmp.eq.s32.totalorder %s36, 1
      %p320 = por %p318, %p319
      %p321 = scmp.ne.s32.totalorder %s310, %s311
      %p322 = scmp.eq.s32.totalorder %s36, 0
      %p323 = por %p321, %p322
      %p324 = scmp.ne.s32.totalorder %s310, %s311
      %p325 = scmp.eq.s32.totalorder %s37, 1
      %p326 = por %p324, %p325
      %p328 = scmp.ne.s32.totalorder %s311, %s327
      %p329 = scmp.eq.s32.totalorder %s37, 0
      %p330 = por %p328, %p329
      %s331 = ssub.s32 %s38, %s50
      %s332 = ssub.s32 %s39, %s46
      %s333 = sor.u32 %s331, %s332
      %p334 = scmp.eq.s32.totalorder %s333, 0
      %s336 = sadd.s32 %s335, 1
      %s337 = scalar_select %p334, %s335, %s336
      %p340 = pneg %p334
      %p341 = scmp.eq.s32.totalorder %s31, 1
      %p342 = por %p340, %p341
      %p343 = scmp.ne.s32.totalorder %s335, %s338
      %p344 = scmp.eq.s32.totalorder %s31, 0
      %p345 = por %p343, %p344
      %p346 = scmp.ne.s32.totalorder %s335, %s338
      %p347 = scmp.eq.s32.totalorder %s36, 1
      %p348 = por %p346, %p347
      %p349 = scmp.ne.s32.totalorder %s338, %s339
      %p350 = scmp.eq.s32.totalorder %s36, 0
      %p351 = por %p349, %p350
      %p352 = scmp.ne.s32.totalorder %s338, %s339
      %p353 = scmp.eq.s32.totalorder %s37, 1
      %p354 = por %p352, %p353
      %p356 = scmp.ne.s32.totalorder %s339, %s355
      %p357 = scmp.eq.s32.totalorder %s37, 0
      %p358 = por %p356, %p357
      %s359 = ssub.s32 %s38, %s50
      %s360 = ssub.s32 %s39, %s46
      %s361 = sor.u32 %s359, %s360
      %p362 = scmp.eq.s32.totalorder %s361, 0
      %s364 = sadd.s32 %s363, 1
      %s365 = scalar_select %p362, %s363, %s364
      %p368 = pneg %p362
      %p369 = scmp.eq.s32.totalorder %s31, 1
      %p370 = por %p368, %p369
      %p371 = scmp.ne.s32.totalorder %s363, %s366
      %p372 = scmp.eq.s32.totalorder %s31, 0
      %p373 = por %p371, %p372
      %p374 = scmp.ne.s32.totalorder %s363, %s366
      %p375 = scmp.eq.s32.totalorder %s36, 1
      %p376 = por %p374, %p375
      %p377 = scmp.ne.s32.totalorder %s366, %s367
      %p378 = scmp.eq.s32.totalorder %s36, 0
      %p379 = por %p377, %p378
      %p380 = scmp.ne.s32.totalorder %s366, %s367
      %p381 = scmp.eq.s32.totalorder %s37, 1
      %p382 = por %p380, %p381
      %p384 = scmp.ne.s32.totalorder %s367, %s383
      %p385 = scmp.eq.s32.totalorder %s37, 0
      %p386 = por %p384, %p385
      %p387 = scmp.le.s32.totalorder 1, %s31
      %p388 = scmp.lt.s32.totalorder %s31, 3
      %p389 = pnand %p387, %p388
      %p390 = pneg %p389
      // Predicated region
      $region9: #{tpu_custom_call.1} parent=5 // pred_check
        _
      $region10: #{tpu_custom_call.1} parent=5 // pred_check_branch
        %392 = sbr.rel (%p389) target = $region12
      $region11: #{tpu_custom_call.1} parent=5 // pred_region
        %s393 = ssub.s32 %s31, 1
        // Predicated region
        $region13: #{tpu_custom_call.1} parent=11 // pred_check
          %p394 = pneg %p148
        $region14: #{tpu_custom_call.1} parent=11 // pred_check_branch
          %396 = sbr.rel (%p394) target = $region16
        $region15: #{tpu_custom_call.1} parent=11 // pred_region
          %s398 = ssub.s32 64, 64
          %399 = vsyncadd [#allocation7], %s398
          %s401 = sshll.u32 [#allocation6], 4
          %s402 = int_to_ptr.vmem [resolvable:$true] %s401
          %404 = dma.hbm_to_vmem [thread:$0]  %s3, 64, %s402, [#allocation7]
        $region16: #{tpu_custom_call.1} parent=11 // pred_fallthru
          _
        // Predicated region
        $region17: #{tpu_custom_call.1} parent=11 // pred_check
          %p405 = pneg %p169
        $region18: #{tpu_custom_call.1} parent=11 // pred_check_branch
          %407 = sbr.rel (%p405) target = $region20
        $region19: #{tpu_custom_call.1} parent=11 // pred_region
          _
        $region20: #{tpu_custom_call.1} parent=11 // pred_fallthru
          _
        // Predicated region
        $region21: #{tpu_custom_call.1} parent=11 // pred_check
          %p408 = pneg %p190
        $region22: #{tpu_custom_call.1} parent=11 // pred_check_branch
          %410 = sbr.rel (%p408) target = $region24
        $region23: #{tpu_custom_call.1} parent=11 // pred_region
          %s412 = ssub.s32 128, 128
          %413 = vsyncadd [#allocation7], %s412
          %s415 = sshll.u32 [#allocation8], 4
          %s416 = int_to_ptr.vmem [resolvable:$true] %s415
          %418 = dma.hbm_to_vmem [thread:$0]  %s5, 128, %s416, [#allocation7]
        $region24: #{tpu_custom_call.1} parent=11 // pred_fallthru
          _
        // Predicated region
        $region25: #{tpu_custom_call.1} parent=11 // pred_check
          %p419 = pneg %p211
        $region26: #{tpu_custom_call.1} parent=11 // pred_check_branch
          %421 = sbr.rel (%p419) target = $region28
        $region27: #{tpu_custom_call.1} parent=11 // pred_region
          _
        $region28: #{tpu_custom_call.1} parent=11 // pred_fallthru
          _
        // Predicated region
        $region29: #{tpu_custom_call.1} parent=11 // pred_check
          %p422 = pneg %p232
        $region30: #{tpu_custom_call.1} parent=11 // pred_check_branch
          %424 = sbr.rel (%p422) target = $region32
        $region31: #{tpu_custom_call.1} parent=11 // pred_region
          %s426 = ssub.s32 128, 128
          %427 = vsyncadd [#allocation10], %s426
          %s429 = sshll.u32 [#allocation9], 4
          %s430 = int_to_ptr.vmem [resolvable:$true] %s429
          %432 = dma.hbm_to_vmem [thread:$0]  %s7, 128, %s430, [#allocation10]
        $region32: #{tpu_custom_call.1} parent=11 // pred_fallthru
          _
        // Predicated region
        $region33: #{tpu_custom_call.1} parent=11 // pred_check
          %p433 = pneg %p253
        $region34: #{tpu_custom_call.1} parent=11 // pred_check_branch
          %435 = sbr.rel (%p433) target = $region36
        $region35: #{tpu_custom_call.1} parent=11 // pred_region
          _
        $region36: #{tpu_custom_call.1} parent=11 // pred_fallthru
          _
        // Predicated region
        $region37: #{tpu_custom_call.1} parent=11 // pred_check
          %p436 = pneg %p274
        $region38: #{tpu_custom_call.1} parent=11 // pred_check_branch
          %438 = sbr.rel (%p436) target = $region40
        $region39: #{tpu_custom_call.1} parent=11 // pred_region
          _
        $region40: #{tpu_custom_call.1} parent=11 // pred_fallthru
          _
        // Predicated region
        $region41: #{tpu_custom_call.1} parent=11 // pred_check
          %p439 = pneg %p295
        $region42: #{tpu_custom_call.1} parent=11 // pred_check_branch
          %441 = sbr.rel (%p439) target = $region44
        $region43: #{tpu_custom_call.1} parent=11 // pred_region
          _
        $region44: #{tpu_custom_call.1} parent=11 // pred_fallthru
          _
      $region12: #{tpu_custom_call.1} parent=5 // pred_fallthru
        _
      %p442 = scmp.lt.s32.totalorder %s31, 2
      // Predicated region
      $region45: #{tpu_custom_call.1} parent=5 // pred_check
        %p443 = pneg %p442
      $region46: #{tpu_custom_call.1} parent=5 // pred_check_branch
        %445 = sbr.rel (%p443) target = $region48
      $region47: #{tpu_custom_call.1} parent=5 // pred_region
        // Predicated region
        $region49: #{tpu_custom_call.1} parent=47 // pred_check
          %p446 = pneg %p65
        $region50: #{tpu_custom_call.1} parent=47 // pred_check_branch
          %448 = sbr.rel (%p446) target = $region52
        $region51: #{tpu_custom_call.1} parent=47 // pred_region
          %p449 = scmp.lt.s32.totalorder %s38, 1
          %s450 = scalar_select %p449, %s38, 1
          %p451 = scmp.lt.s32.totalorder %s39, 0
          %s452 = scalar_select %p451, %s39, 0
          %s453 = sadd.s32 %s452, %s450
          %s454 = smul.addr %s453, 8
          %s455 = scalar_lea.vmem %s0, %s454
        $region52: #{tpu_custom_call.1} parent=47 // pred_fallthru
          _
        // Predicated region
        $region53: #{tpu_custom_call.1} parent=47 // pred_check
          %p456 = pneg %p93
        $region54: #{tpu_custom_call.1} parent=47 // pred_check_branch
          %458 = sbr.rel (%p456) target = $region56
        $region55: #{tpu_custom_call.1} parent=47 // pred_region
          %p459 = scmp.lt.s32.totalorder %s38, 1
          %s460 = scalar_select %p459, %s38, 1
          %p461 = scmp.lt.s32.totalorder %s39, 0
          %s462 = scalar_select %p461, %s39, 0
          %s463 = sadd.s32 %s462, %s460
          %s464 = smul.addr %s463, 8
          %s465 = scalar_lea.vmem %s1, %s464
        $region56: #{tpu_custom_call.1} parent=47 // pred_fallthru
          _
        // Predicated region
        $region57: #{tpu_custom_call.1} parent=47 // pred_check
          %p466 = pneg %p121
        $region58: #{tpu_custom_call.1} parent=47 // pred_check_branch
          %468 = sbr.rel (%p466) target = $region60
        $region59: #{tpu_custom_call.1} parent=47 // pred_region
          %s469 = sand.u32 %s111, 1
          %s470 = scalar_lea.sflag [#allocation4], %s469
          %s471 = sand.u32 %s111, 1
          %s472 = smul.addr %s471, 8
          %s473 = scalar_lea.vmem [#allocation3], %s472
          %s475 = ssub.s32 128, 128
          %476 = vsyncadd %s470, %s475
          %s477 = sadd.s32 %s39, %s38
          %s478 = smul.addr %s477, 128
          %s479 = scalar_lea.hbm %s2, %s478
          %s481 = sshll.u32 %s473, 4
          %s482 = int_to_ptr.vmem [resolvable:$true] %s481
          %484 = dma.hbm_to_vmem [thread:$0]  %s479, 128, %s482, %s470
        $region60: #{tpu_custom_call.1} parent=47 // pred_fallthru
          _
      $region48: #{tpu_custom_call.1} parent=5 // pred_fallthru
        _
      %p485 = scmp.le.s32.totalorder 1, %s31
      %p486 = scmp.lt.s32.totalorder %s31, 3
      %p487 = pnand %p485, %p486
      %p488 = pneg %p487
      // Predicated region
      $region61: #{tpu_custom_call.1} parent=5 // pred_check
        _
      $region62: #{tpu_custom_call.1} parent=5 // pred_check_branch
        %490 = sbr.rel (%p487) target = $region64
      $region63: #{tpu_custom_call.1} parent=5 // pred_region
        %s491 = ssub.s32 %s31, 1
        %s492 = sand.u32 %s114, 1
        %s493 = scalar_lea.sflag [#allocation4], %s492
        %s494 = sand.u32 %s114, 1
        %s495 = smul.addr %s494, 8
        %s496 = scalar_lea.vmem [#allocation3], %s495
        // Predicated region
        $region65: #{tpu_custom_call.1} parent=63 // pred_check
          %p497 = pneg %p127
        $region66: #{tpu_custom_call.1} parent=63 // pred_check_branch
          %499 = sbr.rel (%p497) target = $region68
        $region67: #{tpu_custom_call.1} parent=63 // pred_region
          %500 = dma.done %s493, 128
        $region68: #{tpu_custom_call.1} parent=63 // pred_fallthru
          _
        // Predicated region
        $region69: #{tpu_custom_call.1} parent=63 // pred_check
          %p501 = pneg %p148
        $region70: #{tpu_custom_call.1} parent=63 // pred_check_branch
          %503 = sbr.rel (%p501) target = $region72
        $region71: #{tpu_custom_call.1} parent=63 // pred_region
          %504 = dma.done [#allocation7], 64
        $region72: #{tpu_custom_call.1} parent=63 // pred_fallthru
          _
        // Predicated region
        $region73: #{tpu_custom_call.1} parent=63 // pred_check
          %p505 = pneg %p190
        $region74: #{tpu_custom_call.1} parent=63 // pred_check_branch
          %507 = sbr.rel (%p505) target = $region76
        $region75: #{tpu_custom_call.1} parent=63 // pred_region
          %508 = dma.done [#allocation7], 128
        $region76: #{tpu_custom_call.1} parent=63 // pred_fallthru
          _
        // Predicated region
        $region77: #{tpu_custom_call.1} parent=63 // pred_check
          %p509 = pneg %p232
        $region78: #{tpu_custom_call.1} parent=63 // pred_check_branch
          %511 = sbr.rel (%p509) target = $region80
        $region79: #{tpu_custom_call.1} parent=63 // pred_region
          %512 = dma.done [#allocation10], 128
        $region80: #{tpu_custom_call.1} parent=63 // pred_fallthru
          _
        %p513 = scmp.lt.s32.totalorder %s40, 1
        %s514 = scalar_select %p513, %s40, 1
        %p515 = scmp.lt.s32.totalorder %s41, 0
        %s516 = scalar_select %p515, %s41, 0
        %s517 = sadd.s32 %s516, %s514
        %s518 = smul.addr %s517, 8
        %s519 = scalar_lea.vmem %s0, %s518
        %p520 = pneg %p71
        %p521 = pneg %p68
        %p522 = scmp.lt.s32.totalorder %s40, 1
        %s523 = scalar_select %p522, %s40, 1
        %p524 = scmp.lt.s32.totalorder %s41, 0
        %s525 = scalar_select %p524, %s41, 0
        %s526 = sadd.s32 %s525, %s523
        %s527 = smul.addr %s526, 8
        %s528 = scalar_lea.vmem %s1, %s527
        %p529 = pneg %p99
        %p530 = pneg %p96
        %s531 = sand.u32 %s114, 1
        %s532 = scalar_lea.sflag [#allocation4], %s531
        %s533 = sand.u32 %s114, 1
        %s534 = smul.addr %s533, 8
        %s535 = scalar_lea.vmem [#allocation3], %s534
        %p536 = pneg %p127
        %p537 = pneg %p124
        %p538 = pneg %p148
        %p539 = pneg %p145
        %p540 = pneg %p169
        %p541 = pneg %p166
        %p542 = pneg %p190
        %p543 = pneg %p187
        %p544 = pneg %p211
        %p545 = pneg %p208
        %p546 = pneg %p232
        %p547 = pneg %p229
        %p548 = pneg %p253
        %p549 = pneg %p250
        %p550 = pneg %p274
        %p551 = pneg %p271
        %p552 = pneg %p295
        %p553 = pneg %p292
        %p554 = pneg %p323
        %p555 = pneg %p320
        %s556 = sand.u32 %s310, 1
        %s557 = scalar_lea.sflag [#allocation5], %s556
        %s558 = sand.u32 %s310, 1
        %s559 = smul.addr %s558, 4
        %s560 = scalar_lea.vmem [#allocation11], %s559
        %p561 = pneg %p351
        %p562 = pneg %p348
        %s563 = sand.u32 %s338, 1
        %s564 = scalar_lea.sflag [#allocation13], %s563
        %s565 = sand.u32 %s338, 1
        %s566 = smul.addr %s565, 8
        %s567 = scalar_lea.vmem [#allocation12], %s566
        %p568 = pneg %p379
        %p569 = pneg %p376
        %p570 = scmp.lt.s32.totalorder %s40, 1
        %s571 = scalar_select %p570, %s40, 1
        %p572 = scmp.lt.s32.totalorder %s41, 0
        %s573 = scalar_select %p572, %s41, 0
        %s574 = smul.addr %s571, 2
        %s575 = sadd.s32 %s573, %s574
        %s576 = smul.addr %s575, 8
        %s577 = scalar_lea.vmem %s13, %s576
        %p578 = scmp.lt.s32.totalorder %s40, 1
        %s579 = scalar_select %p578, %s40, 1
        %p580 = scmp.lt.s32.totalorder %s41, 0
        %s581 = scalar_select %p580, %s41, 0
        %s582 = sadd.s32 %s581, %s579
        %s583 = smul.addr %s582, 8
        %s584 = scalar_lea.vmem %s0, %s583
        %p585 = scmp.lt.s32.totalorder %s40, 1
        %s586 = scalar_select %p585, %s40, 1
        %p587 = scmp.lt.s32.totalorder %s41, 0
        %s588 = scalar_select %p587, %s41, 0
        %s589 = sadd.s32 %s588, %s586
        %s590 = smul.addr %s589, 8
        %s591 = scalar_lea.vmem %s1, %s590
        %p592 = scmp.lt.s32.totalorder %s40, 1
        %s593 = scalar_select %p592, %s40, 1
        %p594 = scmp.lt.s32.totalorder %s41, 0
        %s595 = scalar_select %p594, %s41, 0
        %s596 = smul.addr %s593, 2
        %s597 = sadd.s32 %s595, %s596
        %s598 = smul.addr %s597, 8
        %s599 = scalar_lea.vmem %s13, %s598
        %v600 = vld [vmem:[%s584] sm:$0xff]
        %vm601 = vcmask 31744
        %602 = vst.msk [vmem:[#allocation2] sm:$0xff] %vm601, %v600
        %v603 = vld [vmem:[#allocation6] sm:$0xf]
        %v604 = vld [vmem:[%s4] sm:$0x1]
        %v605 = vld [vmem:[#allocation8] sm:$0xff]
        %v606 = vld [vmem:[%s6] sm:$0x1]
        %v608 = vlaneseq
        %v609 = vshrl.u32 %v608, 7
        %v610 = vsub.s32 0, %v609
        %v611 = vrot.slane %v604, %v610
        %v614 = vsel %vm601, %v600, 0
        %vm616 = vcmask 1043456
        %v618 = vsel %vm616, %v603, 0
        %620 = vmatprep.subr.mxu0 0.0
        %621 = vmatpush1.msra.mxu0 0.0
        %622 = vmatprep.subr.mxu0 0.0
        %623 = vmatpush1.msra.mxu0 0.0
        %624 = vmatprep.subr.mxu0 0.0
        %625 = vmatpush1.msra.mxu0 0.0
        %626 = vmatprep.subr.mxu0 0.0
        %627 = vmatpush1.msra.mxu0 0.0
        %628 = vmatprep.subr.mxu0 0.0
        %629 = vmatpush1.msra.mxu0 0.0
        %630 = vmatprep.subr.mxu0 0.0
        %631 = vmatpush1.msra.mxu0 0.0
        %632 = vmatprep.subr.mxu0 0.0
        %633 = vmatpush1.msra.mxu0 0.0
        %634 = vmatprep.subr.mxu0 0.0
        %635 = vmatpush1.msra.mxu0 0.0
        %636 = vmatprep.subr.mxu0 0.0
        %637 = vmatpush1.msra.mxu0 0.0
        %638 = vmatprep.subr.mxu0 0.0
        %639 = vmatpush1.msra.mxu0 0.0
        %640 = vmatprep.subr.mxu0 0.0
        %641 = vmatpush1.msra.mxu0 0.0
        %642 = vmatprep.subr.mxu0 0.0
        %643 = vmatpush1.msra.mxu0 0.0
        %644 = vmatprep.subr.mxu0 0.0
        %645 = vmatpush1.msra.mxu0 0.0
        %646 = vmatprep.subr.mxu0 0.0
        %647 = vmatpush1.msra.mxu0 0.0
        %648 = vmatprep.subr.mxu0 0.0
        %649 = vmatpush1.msra.mxu0 0.0
        %650 = vmatprep.subr.mxu0 0.0
        %651 = vmatpush1.msra.mxu0 %v618
        %652 = vmatprep.subr.mxu0 0.0
        %653 = vmatpush2.msra.mxu0 0.0
        %654 = vmatprep.subr.mxu0 0.0
        %655 = vmatpush2.msra.mxu0 0.0
        %656 = vmatprep.subr.mxu0 0.0
        %657 = vmatpush2.msra.mxu0 0.0
        %658 = vmatprep.subr.mxu0 0.0
        %659 = vmatpush2.msra.mxu0 0.0
        %660 = vmatprep.subr.mxu0 0.0
        %661 = vmatpush2.msra.mxu0 0.0
        %662 = vmatprep.subr.mxu0 0.0
        %663 = vmatpush2.msra.mxu0 0.0
        %664 = vmatprep.subr.mxu0 0.0
        %665 = vmatpush2.msra.mxu0 0.0
        %666 = vmatprep.subr.mxu0 0.0
        %667 = vmatpush2.msra.mxu0 0.0
        %668 = vmatprep.subr.mxu0 0.0
        %669 = vmatpush2.msra.mxu0 0.0
        %670 = vmatprep.subr.mxu0 0.0
        %671 = vmatpush2.msra.mxu0 0.0
        %672 = vmatprep.subr.mxu0 0.0
        %673 = vmatpush2.msra.mxu0 0.0
        %674 = vmatprep.subr.mxu0 0.0
        %675 = vmatpush2.msra.mxu0 0.0
        %676 = vmatprep.subr.mxu0 0.0
        %677 = vmatpush2.msra.mxu0 0.0
        %678 = vmatprep.subr.mxu0 0.0
        %679 = vmatpush2.msra.mxu0 0.0
        %680 = vmatprep.subr.mxu0 0.0
        %681 = vmatpush2.msra.mxu0 0.0
        %682 = vmatprep.subr.mxu0 0.0
        %683 = vmatpush2.msra.mxu0 0.0
        %684 = vmatprep.mubr.f32.mxu0 0.0
        %685 = vmatmul.mubr.f32.gmra.mxu0 %v614
        %v686 = vpop.f32.mrf.mxu0
        %v687 = vadd.f32 %v611, %v686
        %v688 = vpop.f32.mrf.mxu0
        %689 = vdwg.mxu0
        %v690 = vmul.f32 %v687, 0.5
        %v691 = vmul.f32 %v687, 0.70710677
        %v692 = verf.f32.pop %v691
        %v693 = vadd.f32 %v692, 1.0
        %v694 = vmul.f32 %v690, %v693
        %v696 = vlaneseq
        %v697 = vshrl.u32 %v696, 7
        %v698 = vsub.s32 0, %v697
        %v699 = vrot.slane %v606, %v698
        %vm701 = vcmask 64512
        %v703 = vsel %vm701, %v694, 0
        %705 = vmatprep.subr.mxu0 0.0
        %706 = vmatpush1.msra.mxu0 0.0
        %707 = vmatprep.subr.mxu0 0.0
        %708 = vmatpush1.msra.mxu0 0.0
        %709 = vmatprep.subr.mxu0 0.0
        %710 = vmatpush1.msra.mxu0 0.0
        %711 = vmatprep.subr.mxu0 0.0
        %712 = vmatpush1.msra.mxu0 0.0
        %713 = vmatprep.subr.mxu0 0.0
        %714 = vmatpush1.msra.mxu0 0.0
        %715 = vmatprep.subr.mxu0 0.0
        %716 = vmatpush1.msra.mxu0 0.0
        %717 = vmatprep.subr.mxu0 0.0
        %718 = vmatpush1.msra.mxu0 0.0
        %719 = vmatprep.subr.mxu0 0.0
        %720 = vmatpush1.msra.mxu0 0.0
        %721 = vmatprep.subr.mxu0 0.0
        %722 = vmatpush1.msra.mxu0 0.0
        %723 = vmatprep.subr.mxu0 0.0
        %724 = vmatpush1.msra.mxu0 0.0
        %725 = vmatprep.subr.mxu0 0.0
        %726 = vmatpush1.msra.mxu0 0.0
        %727 = vmatprep.subr.mxu0 0.0
        %728 = vmatpush1.msra.mxu0 0.0
        %729 = vmatprep.subr.mxu0 0.0
        %730 = vmatpush1.msra.mxu0 0.0
        %731 = vmatprep.subr.mxu0 0.0
        %732 = vmatpush1.msra.mxu0 0.0
        %733 = vmatprep.subr.mxu0 0.0
        %734 = vmatpush1.msra.mxu0 0.0
        %735 = vmatprep.subr.mxu0 0.0
        %736 = vmatpush1.msra.mxu0 %v605
        %737 = vmatprep.subr.mxu0 0.0
        %738 = vmatpush2.msra.mxu0 0.0
        %739 = vmatprep.subr.mxu0 0.0
        %740 = vmatpush2.msra.mxu0 0.0
        %741 = vmatprep.subr.mxu0 0.0
        %742 = vmatpush2.msra.mxu0 0.0
        %743 = vmatprep.subr.mxu0 0.0
        %744 = vmatpush2.msra.mxu0 0.0
        %745 = vmatprep.subr.mxu0 0.0
        %746 = vmatpush2.msra.mxu0 0.0
        %747 = vmatprep.subr.mxu0 0.0
        %748 = vmatpush2.msra.mxu0 0.0
        %749 = vmatprep.subr.mxu0 0.0
        %750 = vmatpush2.msra.mxu0 0.0
        %751 = vmatprep.subr.mxu0 0.0
        %752 = vmatpush2.msra.mxu0 0.0
        %753 = vmatprep.subr.mxu0 0.0
        %754 = vmatpush2.msra.mxu0 0.0
        %755 = vmatprep.subr.mxu0 0.0
        %756 = vmatpush2.msra.mxu0 0.0
        %757 = vmatprep.subr.mxu0 0.0
        %758 = vmatpush2.msra.mxu0 0.0
        %759 = vmatprep.subr.mxu0 0.0
        %760 = vmatpush2.msra.mxu0 0.0
        %761 = vmatprep.subr.mxu0 0.0
        %762 = vmatpush2.msra.mxu0 0.0
        %763 = vmatprep.subr.mxu0 0.0
        %764 = vmatpush2.msra.mxu0 0.0
        %765 = vmatprep.subr.mxu0 0.0
        %766 = vmatpush2.msra.mxu0 0.0
        %767 = vmatprep.subr.mxu0 0.0
        %768 = vmatpush2.msra.mxu0 0.0
        %769 = vmatprep.mubr.f32.mxu0 0.0
        %770 = vmatmul.mubr.f32.gmra.mxu0 %v703
        %v771 = vpop.f32.mrf.mxu0
        %v772 = vadd.f32 %v699, %v771
        %v773 = vpop.f32.mrf.mxu0
        %774 = vdwg.mxu0
        %v775 = vld [vmem:[%s591] sm:$0xff]
        %v776 = vadd.f32 %v775, %v772
        %778 = vrot.lane.b32.xlu0 %v776, 4
        %v779 = vpop.permute.xlu0 %778
        %vm781 = vcmask 97312
        %782 = vst.msk [vmem:[#allocation2] sm:$0xff] %vm781, %v779
        %v783 = vld [vmem:[#allocation9] sm:$0xff]
        %v784 = vld [vmem:[%s8] sm:$0x1]
        %v785 = vld [vmem:[%s9] sm:$0xff]
        %v786 = vld [vmem:[%s9 + $0x8] sm:$0xff]
        %v787 = vld [vmem:[%s10] sm:$0x1]
        %v789 = vlaneseq
        %v790 = vshrl.u32 %v789, 7
        %v791 = vsub.s32 0, %v790
        %v792 = vrot.slane %v784, %v791
        %v794 = vsel %vm701, %v776, 0
        %796 = vmatprep.subr.mxu0 0.0
        %797 = vmatpush1.msra.mxu0 0.0
        %798 = vmatprep.subr.mxu0 0.0
        %799 = vmatpush1.msra.mxu0 0.0
        %800 = vmatprep.subr.mxu0 0.0
        %801 = vmatpush1.msra.mxu0 0.0
        %802 = vmatprep.subr.mxu0 0.0
        %803 = vmatpush1.msra.mxu0 0.0
        %804 = vmatprep.subr.mxu0 0.0
        %805 = vmatpush1.msra.mxu0 0.0
        %806 = vmatprep.subr.mxu0 0.0
        %807 = vmatpush1.msra.mxu0 0.0
        %808 = vmatprep.subr.mxu0 0.0
        %809 = vmatpush1.msra.mxu0 0.0
        %810 = vmatprep.subr.mxu0 0.0
        %811 = vmatpush1.msra.mxu0 0.0
        %812 = vmatprep.subr.mxu0 0.0
        %813 = vmatpush1.msra.mxu0 0.0
        %814 = vmatprep.subr.mxu0 0.0
        %815 = vmatpush1.msra.mxu0 0.0
        %816 = vmatprep.subr.mxu0 0.0
        %817 = vmatpush1.msra.mxu0 0.0
        %818 = vmatprep.subr.mxu0 0.0
        %819 = vmatpush1.msra.mxu0 0.0
        %820 = vmatprep.subr.mxu0 0.0
        %821 = vmatpush1.msra.mxu0 0.0
        %822 = vmatprep.subr.mxu0 0.0
        %823 = vmatpush1.msra.mxu0 0.0
        %824 = vmatprep.subr.mxu0 0.0
        %825 = vmatpush1.msra.mxu0 0.0
        %826 = vmatprep.subr.mxu0 0.0
        %827 = vmatpush1.msra.mxu0 %v783
        %828 = vmatprep.subr.mxu0 0.0
        %829 = vmatpush2.msra.mxu0 0.0
        %830 = vmatprep.subr.mxu0 0.0
        %831 = vmatpush2.msra.mxu0 0.0
        %832 = vmatprep.subr.mxu0 0.0
        %833 = vmatpush2.msra.mxu0 0.0
        %834 = vmatprep.subr.mxu0 0.0
        %835 = vmatpush2.msra.mxu0 0.0
        %836 = vmatprep.subr.mxu0 0.0
        %837 = vmatpush2.msra.mxu0 0.0
        %838 = vmatprep.subr.mxu0 0.0
        %839 = vmatpush2.msra.mxu0 0.0
        %840 = vmatprep.subr.mxu0 0.0
        %841 = vmatpush2.msra.mxu0 0.0
        %842 = vmatprep.subr.mxu0 0.0
        %843 = vmatpush2.msra.mxu0 0.0
        %844 = vmatprep.subr.mxu0 0.0
        %845 = vmatpush2.msra.mxu0 0.0
        %846 = vmatprep.subr.mxu0 0.0
        %847 = vmatpush2.msra.mxu0 0.0
        %848 = vmatprep.subr.mxu0 0.0
        %849 = vmatpush2.msra.mxu0 0.0
        %850 = vmatprep.subr.mxu0 0.0
        %851 = vmatpush2.msra.mxu0 0.0
        %852 = vmatprep.subr.mxu0 0.0
        %853 = vmatpush2.msra.mxu0 0.0
        %854 = vmatprep.subr.mxu0 0.0
        %855 = vmatpush2.msra.mxu0 0.0
        %856 = vmatprep.subr.mxu0 0.0
        %857 = vmatpush2.msra.mxu0 0.0
        %858 = vmatprep.subr.mxu0 0.0
        %859 = vmatpush2.msra.mxu0 0.0
        %860 = vmatprep.mubr.f32.mxu0 0.0
        %861 = vmatmul.mubr.f32.gmra.mxu0 %v794
        %v862 = vpop.f32.mrf.mxu0
        %v863 = vadd.f32 %v792, %v862
        %v864 = vpop.f32.mrf.mxu0
        %865 = vdwg.mxu0
        %v866 = vmul.f32 %v863, 0.5
        %v867 = vmul.f32 %v863, 0.70710677
        %v868 = verf.f32.pop %v867
        %v869 = vadd.f32 %v868, 1.0
        %v870 = vmul.f32 %v866, %v869
        %v872 = vlaneseq
        %v873 = vshrl.u32 %v872, 7
        %v874 = vsub.s32 0, %v873
        %v875 = vrot.slane %v787, %v874
        %vm877 = vcmask 130048
        %v879 = vsel %vm877, %v870, 0
        %881 = vmatprep.subr.mxu0 0.0
        %882 = vmatpush1.msra.mxu0 0.0
        %883 = vmatprep.subr.mxu0 0.0
        %884 = vmatpush1.msra.mxu0 0.0
        %885 = vmatprep.subr.mxu0 0.0
        %886 = vmatpush1.msra.mxu0 0.0
        %887 = vmatprep.subr.mxu0 0.0
        %888 = vmatpush1.msra.mxu0 0.0
        %889 = vmatprep.subr.mxu0 0.0
        %890 = vmatpush1.msra.mxu0 0.0
        %891 = vmatprep.subr.mxu0 0.0
        %892 = vmatpush1.msra.mxu0 0.0
        %893 = vmatprep.subr.mxu0 0.0
        %894 = vmatpush1.msra.mxu0 0.0
        %895 = vmatprep.subr.mxu0 0.0
        %896 = vmatpush1.msra.mxu0 0.0
        %897 = vmatprep.subr.mxu0 0.0
        %898 = vmatpush1.msra.mxu0 0.0
        %899 = vmatprep.subr.mxu0 0.0
        %900 = vmatpush1.msra.mxu0 0.0
        %901 = vmatprep.subr.mxu0 0.0
        %902 = vmatpush1.msra.mxu0 0.0
        %903 = vmatprep.subr.mxu0 0.0
        %904 = vmatpush1.msra.mxu0 0.0
        %905 = vmatprep.subr.mxu0 0.0
        %906 = vmatpush1.msra.mxu0 0.0
        %907 = vmatprep.subr.mxu0 0.0
        %908 = vmatpush1.msra.mxu0 0.0
        %909 = vmatprep.subr.mxu0 0.0
        %910 = vmatpush1.msra.mxu0 %v786
        %911 = vmatprep.subr.mxu0 0.0
        %912 = vmatpush1.msra.mxu0 %v785
        %913 = vmatprep.subr.mxu0 0.0
        %914 = vmatpush2.msra.mxu0 0.0
        %915 = vmatprep.subr.mxu0 0.0
        %916 = vmatpush2.msra.mxu0 0.0
        %917 = vmatprep.subr.mxu0 0.0
        %918 = vmatpush2.msra.mxu0 0.0
        %919 = vmatprep.subr.mxu0 0.0
        %920 = vmatpush2.msra.mxu0 0.0
        %921 = vmatprep.subr.mxu0 0.0
        %922 = vmatpush2.msra.mxu0 0.0
        %923 = vmatprep.subr.mxu0 0.0
        %924 = vmatpush2.msra.mxu0 0.0
        %925 = vmatprep.subr.mxu0 0.0
        %926 = vmatpush2.msra.mxu0 0.0
        %927 = vmatprep.subr.mxu0 0.0
        %928 = vmatpush2.msra.mxu0 0.0
        %929 = vmatprep.subr.mxu0 0.0
        %930 = vmatpush2.msra.mxu0 0.0
        %931 = vmatprep.subr.mxu0 0.0
        %932 = vmatpush2.msra.mxu0 0.0
        %933 = vmatprep.subr.mxu0 0.0
        %934 = vmatpush2.msra.mxu0 0.0
        %935 = vmatprep.subr.mxu0 0.0
        %936 = vmatpush2.msra.mxu0 0.0
        %937 = vmatprep.subr.mxu0 0.0
        %938 = vmatpush2.msra.mxu0 0.0
        %939 = vmatprep.subr.mxu0 0.0
        %940 = vmatpush2.msra.mxu0 0.0
        %941 = vmatprep.subr.mxu0 0.0
        %942 = vmatpush2.msra.mxu0 0.0
        %943 = vmatprep.subr.mxu0 0.0
        %944 = vmatpush2.msra.mxu0 0.0
        %945 = vmatprep.mubr.f32.mxu0 0.0
        %946 = vmatmul.mubr.f32.gmra.mxu0 %v879
        %v947 = vpop.f32.mrf.mxu0
        %v948 = vadd.f32 %v875, %v947
        %v949 = vpop.f32.mrf.mxu0
        %950 = vdwg.mxu0
        %v951 = vld [vmem:[%s496] sm:$0xff]
        %v952 = vadd.f32 %v951, %v948
        %954 = vrot.lane.b32.xlu0 %v952, 12
        %v955 = vpop.permute.xlu0 %954
        %vm957 = vcmask 228448
        %958 = vst.msk [vmem:[#allocation2] sm:$0xff] %vm957, %v955
        %v959 = vld [vmem:[#allocation2] sm:$0xff]
        %v960 = vld [vmem:[#allocation2 + $0x8] sm:$0xff]
        %v961 = vld [vmem:[#allocation2 + $0x10] sm:$0xff]
        %v962 = vld [vmem:[#allocation2 + $0x18] sm:$0xff]
        %v963 = vld [vmem:[#allocation2 + $0x20] sm:$0xff]
        %v964 = vld [vmem:[#allocation2 + $0x28] sm:$0xff]
        %v965 = vld [vmem:[#allocation2 + $0x30] sm:$0xff]
        %v966 = vld [vmem:[#allocation2 + $0x38] sm:$0xff]
        %v967 = vld [vmem:[#allocation2 + $0x40] sm:$0xff]
        %v968 = vld [vmem:[#allocation2 + $0x48] sm:$0xff]
        %v969 = vld [vmem:[#allocation2 + $0x50] sm:$0xff]
        %v970 = vld [vmem:[#allocation2 + $0x58] sm:$0xff]
        %v971 = vld [vmem:[#allocation2 + $0x60] sm:$0xff]
        %v972 = vld [vmem:[#allocation2 + $0x68] sm:$0xff]
        %v973 = vld [vmem:[#allocation2 + $0x70] sm:$0xff]
        %v974 = vld [vmem:[#allocation2 + $0x78] sm:$0xff]
        %975 = vxpose.xlu0.b32.start [1/16] %v959, 128
        %976 = vxpose.xlu0.b32.cont [2/16] %v960, 128
        %977 = vxpose.xlu0.b32.cont [3/16] %v961, 128
        %978 = vxpose.xlu0.b32.cont [4/16] %v962, 128
        %979 = vxpose.xlu0.b32.cont [5/16] %v963, 128
        %980 = vxpose.xlu0.b32.cont [6/16] %v964, 128
        %981 = vxpose.xlu0.b32.cont [7/16] %v965, 128
        %982 = vxpose.xlu0.b32.cont [8/16] %v966, 128
        %983 = vxpose.xlu0.b32.cont [9/16] %v967, 128
        %984 = vxpose.xlu0.b32.cont [10/16] %v968, 128
        %985 = vxpose.xlu0.b32.cont [11/16] %v969, 128
        %986 = vxpose.xlu0.b32.cont [12/16] %v970, 128
        %987 = vxpose.xlu0.b32.cont [13/16] %v971, 128
        %988 = vxpose.xlu0.b32.cont [14/16] %v972, 128
        %989 = vxpose.xlu0.b32.cont [15/16] %v973, 128
        %990 = vxpose.xlu0.b32.end [16/16] %v974, 128
        %v991 = vpop.trf.xlu0
        %v992 = vpop.trf.xlu0
        %v993 = vpop.trf.xlu0
        %v994 = vpop.trf.xlu0
        %v995 = vpop.trf.xlu0
        %v996 = vpop.trf.xlu0
        %v997 = vpop.trf.xlu0
        %v998 = vpop.trf.xlu0
        %v999 = vpop.trf.xlu0
        %v1000 = vpop.trf.xlu0
        %v1001 = vpop.trf.xlu0
        %v1002 = vpop.trf.xlu0
        %v1003 = vpop.trf.xlu0
        %v1004 = vpop.trf.xlu0
        %v1005 = vpop.trf.xlu0
        %v1006 = vpop.trf.xlu0
        %vm1007 = vcmask 60416
        %1008 = vst.msk [vmem:[%s560] sm:$0xf] %vm1007, %v991
        %vm1009 = vcmask 64516
        %1010 = vst.msk [vmem:[%s567 - $0x4] sm:$0xf0] %vm1009, %v991
        %1011 = vst.msk [vmem:[%s567 + $0x4] sm:$0xf] %vm1007, %v992
        %1012 = vst.msk [vmem:[%s599 - $0x4] sm:$0xf0] %vm1009, %v992
        %1013 = vst.msk [vmem:[%s599 + $0x4] sm:$0xff] %vm701, %v993
        %1014 = vst.msk [vmem:[%s599 + $0xc] sm:$0xf] %vm1007, %v994
        %s1015 = sand.u32 %s310, 1
        %s1016 = scalar_lea.sflag [#allocation5], %s1015
        %s1017 = sand.u32 %s310, 1
        %s1018 = smul.addr %s1017, 4
        %s1019 = scalar_lea.vmem [#allocation11], %s1018
        %s1020 = sand.u32 %s338, 1
        %s1021 = scalar_lea.sflag [#allocation13], %s1020
        %s1022 = sand.u32 %s338, 1
        %s1023 = smul.addr %s1022, 8
        %s1024 = scalar_lea.vmem [#allocation12], %s1023
        %p1025 = scmp.lt.s32.totalorder %s40, 1
        %s1026 = scalar_select %p1025, %s40, 1
        %p1027 = scmp.lt.s32.totalorder %s41, 0
        %s1028 = scalar_select %p1027, %s41, 0
        %s1029 = smul.addr %s1026, 2
        %s1030 = sadd.s32 %s1028, %s1029
        %s1031 = smul.addr %s1030, 8
        %s1032 = scalar_lea.vmem %s13, %s1031
        // Predicated region
        $region81: #{tpu_custom_call.1} parent=63 // pred_check
          %p1033 = pneg %p320
        $region82: #{tpu_custom_call.1} parent=63 // pred_check_branch
          %1035 = sbr.rel (%p1033) target = $region84
        $region83: #{tpu_custom_call.1} parent=63 // pred_region
          %s1037 = ssub.s32 64, 64
          %1038 = vsyncadd %s1016, %s1037
          %s1039 = sadd.s32 %s41, %s40
          %s1040 = smul.addr %s1039, 64
          %s1041 = scalar_lea.hbm %s11, %s1040
          %s1043 = sshll.u32 %s1019, 4
          %s1044 = int_to_ptr.vmem [resolvable:$true] %s1043
          %1046 = dma.vmem_to_hbm [thread:$0]  %s1044, 64, %s1041, %s1016
        $region84: #{tpu_custom_call.1} parent=63 // pred_fallthru
          _
        // Predicated region
        $region85: #{tpu_custom_call.1} parent=63 // pred_check
          %p1047 = pneg %p348
        $region86: #{tpu_custom_call.1} parent=63 // pred_check_branch
          %1049 = sbr.rel (%p1047) target = $region88
        $region87: #{tpu_custom_call.1} parent=63 // pred_region
          %s1051 = ssub.s32 128, 128
          %1052 = vsyncadd %s1021, %s1051
          %s1053 = sadd.s32 %s41, %s40
          %s1054 = smul.addr %s1053, 128
          %s1055 = scalar_lea.hbm %s12, %s1054
          %s1057 = sshll.u32 %s1024, 4
          %s1058 = int_to_ptr.vmem [resolvable:$true] %s1057
          %1060 = dma.vmem_to_hbm [thread:$0]  %s1058, 128, %s1055, %s1021
        $region88: #{tpu_custom_call.1} parent=63 // pred_fallthru
          _
        // Predicated region
        $region89: #{tpu_custom_call.1} parent=63 // pred_check
          %p1061 = pneg %p376
        $region90: #{tpu_custom_call.1} parent=63 // pred_check_branch
          %1063 = sbr.rel (%p1061) target = $region92
        $region91: #{tpu_custom_call.1} parent=63 // pred_region
          _
        $region92: #{tpu_custom_call.1} parent=63 // pred_fallthru
          _
      $region64: #{tpu_custom_call.1} parent=5 // pred_fallthru
        _
      %p1064 = scmp.le.s32.totalorder 2, %s31
      // Predicated region
      $region93: #{tpu_custom_call.1} parent=5 // pred_check
        %p1065 = pneg %p1064
      $region94: #{tpu_custom_call.1} parent=5 // pred_check_branch
        %1067 = sbr.rel (%p1065) target = $region96
      $region95: #{tpu_custom_call.1} parent=5 // pred_region
        %s1068 = ssub.s32 %s31, 2
        // Predicated region
        $region97: #{tpu_custom_call.1} parent=95 // pred_check
          %p1069 = pneg %p326
        $region98: #{tpu_custom_call.1} parent=95 // pred_check_branch
          %1071 = sbr.rel (%p1069) target = $region100
        $region99: #{tpu_custom_call.1} parent=95 // pred_region
          %s1072 = sand.u32 %s311, 1
          %s1073 = scalar_lea.sflag [#allocation5], %s1072
          %s1074 = sand.u32 %s311, 1
          %s1075 = smul.addr %s1074, 4
          %s1076 = scalar_lea.vmem [#allocation11], %s1075
          %1077 = dma.done %s1073, 64
        $region100: #{tpu_custom_call.1} parent=95 // pred_fallthru
          _
        // Predicated region
        $region101: #{tpu_custom_call.1} parent=95 // pred_check
          %p1078 = pneg %p354
        $region102: #{tpu_custom_call.1} parent=95 // pred_check_branch
          %1080 = sbr.rel (%p1078) target = $region104
        $region103: #{tpu_custom_call.1} parent=95 // pred_region
          %s1081 = sand.u32 %s339, 1
          %s1082 = scalar_lea.sflag [#allocation13], %s1081
          %s1083 = sand.u32 %s339, 1
          %s1084 = smul.addr %s1083, 8
          %s1085 = scalar_lea.vmem [#allocation12], %s1084
          %1086 = dma.done %s1082, 128
        $region104: #{tpu_custom_call.1} parent=95 // pred_fallthru
          _
        // Predicated region
        $region105: #{tpu_custom_call.1} parent=95 // pred_check
          %p1087 = pneg %p382
        $region106: #{tpu_custom_call.1} parent=95 // pred_check_branch
          %1089 = sbr.rel (%p1087) target = $region108
        $region107: #{tpu_custom_call.1} parent=95 // pred_region
          %p1090 = scmp.lt.s32.totalorder %s42, 1
          %s1091 = scalar_select %p1090, %s42, 1
          %p1092 = scmp.lt.s32.totalorder %s43, 0
          %s1093 = scalar_select %p1092, %s43, 0
          %s1094 = smul.addr %s1091, 2
          %s1095 = sadd.s32 %s1093, %s1094
          %s1096 = smul.addr %s1095, 8
          %s1097 = scalar_lea.vmem %s13, %s1096
        $region108: #{tpu_custom_call.1} parent=95 // pred_fallthru
          _
      $region96: #{tpu_custom_call.1} parent=5 // pred_fallthru
        _
    $region6: #{tpu_custom_call.1} parent=1 // loop_footer
      %s35 = sadd.s32 1, %s31
    $region7: #{tpu_custom_call.1} parent=1 // loop_footer_branch
      %30 = sbr.rel target = $region3
    $region8: #{tpu_custom_call.1} parent=1 // loop_exit
      _
    %1098 = vsyncpa [#allocation4], 1
    %s1099 = scalar_lea.sflag [#allocation4], 1
    %1100 = vsyncpa %s1099, 1
    %1101 = vsyncpa [#allocation7], 1
    %1102 = vsyncpa [#allocation10], 1
    %1103 = vsyncpa [#allocation5], 1
    %s1104 = scalar_lea.sflag [#allocation5], 1
    %1105 = vsyncpa %s1104, 1
    %1106 = vsyncpa [#allocation13], 1
    %s1107 = scalar_lea.sflag [#allocation13], 1
    %1108 = vsyncpa %s1107, 1

</llo_original>
